<compile_context>
chip_gen: v7x
topology: tpu7x:2x2x1
jax: 0.10.0
libtpu: 0.0.40
codegen_flags: <defaults>
</compile_context>

<pallas_src>
import jax
import jax.numpy as jnp
from jax import lax
from jax.experimental import pallas as pl
from jax.experimental.pallas import tpu as pltpu
import numpy as np


def basic_block_kernel(x_ref, w1_ref, s1_ref, b1_ref, w2_ref, s2_ref, b2_ref,
                       out_ref, xv_ref, yv_ref):
    # x_ref  : (H, W*C)      lane-packed input (also the residual)
    # w*_ref : (3, W*C, W*P) banded conv weights, bf16 (one slab per kh tap)
    # s*/b*  : (1, W*P)      folded BN scale / bias, tiled across W
    # out_ref: (H, W*P)
    # xv_ref : (H+2, W*C)    f32 scratch: input with zero top/bottom rows
    # yv_ref : (H+2, W*P)    f32 scratch: conv1 output with zero rows
    H, WP = out_ref.shape
    WC = x_ref.shape[1]

    # Zero only the two vertical-padding border rows, every step (cheap and
    # megacore-safe; the interior is fully overwritten below).  Horizontal
    # padding is already folded into the banded weight matrices.
    zrow_c = jnp.zeros((1, WC), jnp.float32)
    zrow_p = jnp.zeros((1, WP), jnp.float32)
    xv_ref[0:1, :] = zrow_c
    xv_ref[H + 1:H + 2, :] = zrow_c
    yv_ref[0:1, :] = zrow_p
    yv_ref[H + 1:H + 2, :] = zrow_p

    x = x_ref[...].astype(jnp.float32)          # (H, W*C); also the residual
    xv_ref[1:H + 1, :] = x

    # ---- conv1: 3 MXU matmuls (kh taps); kw & cin live on the K axis.
    acc = jnp.zeros((H, WP), dtype=jnp.float32)
    for dh in range(3):                          # static, unrolled
        acc += jnp.dot(xv_ref[dh:dh + H, :].astype(jnp.bfloat16),
                       w1_ref[dh],
                       preferred_element_type=jnp.float32)

    # ---- bn1 (folded, f32 VPU) + relu
    y = jnp.maximum(acc * s1_ref[...] + b1_ref[...], 0.0)
    yv_ref[1:H + 1, :] = y

    # ---- conv2
    acc2 = jnp.zeros((H, WP), dtype=jnp.float32)
    for dh in range(3):
        acc2 += jnp.dot(yv_ref[dh:dh + H, :].astype(jnp.bfloat16),
                        w2_ref[dh],
                        preferred_element_type=jnp.float32)

    # ---- bn2 (folded) + residual add + relu, lane-dense store
    out = jnp.maximum(acc2 * s2_ref[...] + b2_ref[...] + x, 0.0)
    out_ref[...] = out.astype(out_ref.dtype)


def _band_weights(w, W):
    """(3, 3, Cin, Cout) HWIO conv weights -> (3, W*Cin, W*Cout) banded
    matrices (one per kh tap) that implement the kw sweep + SAME horizontal
    padding as a single matmul over the lane-packed (W*Cin) axis."""
    kh, kw, C, P = w.shape
    wi = jnp.arange(W)[:, None]                  # input  spatial position
    wo = jnp.arange(W)[None, :]                  # output spatial position
    dw = wi - wo + 1                             # which kw tap connects them
    valid = (dw >= 0) & (dw <= 2)
    blocks = w[:, jnp.clip(dw, 0, 2)]            # (3, W, W, C, P)
    blocks = blocks * valid[None, :, :, None, None].astype(w.dtype)
    # -> [dh, wi, ci, wo, co] -> (3, W*C, W*P)
    return blocks.transpose(0, 1, 3, 2, 4).reshape(3, W * C, W * P)


def basic_block(x_nhwc, w1, g1, be1, m1, v1, w2, g2, be2, m2, v2, eps=1e-5):
    """Fused BasicBlock forward. x_nhwc: (N, H, W, C) float32, weights HWIO."""
    N, H, W, C = x_nhwc.shape
    P = w1.shape[-1]
    assert C == P, "BasicBlock without downsample requires inplanes == planes"

    # Fold BN (inference mode) into per-channel scale/bias, tiled over W so
    # they broadcast directly against the lane-packed (H, W*P) activations.
    inv1 = g1 / jnp.sqrt(v1 + eps)
    s1 = jnp.tile(inv1, W).reshape(1, W * P)
    b1 = jnp.tile(be1 - m1 * inv1, W).reshape(1, W * P)
    inv2 = g2 / jnp.sqrt(v2 + eps)
    s2 = jnp.tile(inv2, W).reshape(1, W * P)
    b2 = jnp.tile(be2 - m2 * inv2, W).reshape(1, W * P)

    # Banded weight slabs, bf16 for the MXU.
    w1m = _band_weights(w1, W).astype(jnp.bfloat16)
    w2m = _band_weights(w2, W).astype(jnp.bfloat16)

    x2d = x_nhwc.reshape(N, H, W * C)            # free reshape (contiguous)

    flops = 2 * N * 2 * H * W * 9 * C * P        # logical MACs of both convs
    bytes_accessed = (x2d.size * 4 + N * H * W * P * 4
                      + w1m.size * 2 + w2m.size * 2 + 4 * W * P * 4)

    out = pl.pallas_call(
        basic_block_kernel,
        out_shape=jax.ShapeDtypeStruct((N, H, W * P), jnp.float32),
        grid_spec=pltpu.PrefetchScalarGridSpec(
            num_scalar_prefetch=0,
            grid=(N,),                           # one image per grid step
            in_specs=[
                pl.BlockSpec((pl.Squeezed(), H, W * C), lambda b: (b, 0, 0)),
                pl.BlockSpec((3, W * C, W * P), lambda b: (0, 0, 0)),
                pl.BlockSpec((1, W * P), lambda b: (0, 0)),
                pl.BlockSpec((1, W * P), lambda b: (0, 0)),
                pl.BlockSpec((3, W * C, W * P), lambda b: (0, 0, 0)),
                pl.BlockSpec((1, W * P), lambda b: (0, 0)),
                pl.BlockSpec((1, W * P), lambda b: (0, 0)),
            ],
            out_specs=pl.BlockSpec((pl.Squeezed(), H, W * P),
                                   lambda b: (b, 0, 0)),
            scratch_shapes=[pltpu.VMEM((H + 2, W * C), jnp.float32),
                            pltpu.VMEM((H + 2, W * P), jnp.float32)],
        ),
        compiler_params=pltpu.CompilerParams(
            dimension_semantics=("parallel",),
            vmem_limit_bytes=32 * 1024 * 1024),
        cost_estimate=pl.CostEstimate(flops=flops, transcendentals=0,
                                      bytes_accessed=bytes_accessed),
    )(x2d, w1m, s1, b1, w2m, s2, b2)
    return out.reshape(N, H, W, P)


def basic_block_reference(x, w1, g1, be1, m1, v1, w2, g2, be2, m2, v2,
                          eps=1e-5):
    """Pure-JAX reference (NHWC / HWIO), f32."""
    dn = ("NHWC", "HWIO", "NHWC")
    y = lax.conv_general_dilated(x, w1, (1, 1), "SAME", dimension_numbers=dn)
    y = (y - m1) / jnp.sqrt(v1 + eps) * g1 + be1
    y = jnp.maximum(y, 0.0)
    y = lax.conv_general_dilated(y, w2, (1, 1), "SAME", dimension_numbers=dn)
    y = (y - m2) / jnp.sqrt(v2 + eps) * g2 + be2
    y = y + x
    return jnp.maximum(y, 0.0)


if __name__ == "__main__":
    # Small shapes consistent with the module: inplanes = planes = 8,
    # stride=1, downsample=None.
    N, H, W = 2, 16, 16
    inplanes = planes = 8

    key = jax.random.PRNGKey(0)
    ks = jax.random.split(key, 10)

    # NCHW input (PyTorch convention) -> NHWC for the kernel.
    x_nchw = jax.random.normal(ks[0], (N, inplanes, H, W), dtype=jnp.float32)
    x_nhwc = jnp.transpose(x_nchw, (0, 2, 3, 1))

    # Conv weights: PyTorch (out, in, 3, 3) -> HWIO (3, 3, in, out).
    w1_oihw = 0.1 * jax.random.normal(ks[1], (planes, inplanes, 3, 3),
                                      dtype=jnp.float32)
    w2_oihw = 0.1 * jax.random.normal(ks[2], (planes, planes, 3, 3),
                                      dtype=jnp.float32)
    w1 = jnp.transpose(w1_oihw, (2, 3, 1, 0))
    w2 = jnp.transpose(w2_oihw, (2, 3, 1, 0))

    # BatchNorm parameters / running stats (deterministic).
    g1 = 1.0 + 0.1 * jax.random.normal(ks[3], (planes,), dtype=jnp.float32)
    be1 = 0.1 * jax.random.normal(ks[4], (planes,), dtype=jnp.float32)
    m1 = 0.1 * jax.random.normal(ks[5], (planes,), dtype=jnp.float32)
    v1 = jax.random.uniform(ks[6], (planes,), minval=0.5, maxval=1.5,
                            dtype=jnp.float32)
    g2 = 1.0 + 0.1 * jax.random.normal(ks[7], (planes,), dtype=jnp.float32)
    be2 = 0.1 * jax.random.normal(ks[8], (planes,), dtype=jnp.float32)
    m2 = 0.1 * jax.random.normal(ks[9], (planes,), dtype=jnp.float32)
    v2 = jax.random.uniform(jax.random.PRNGKey(1), (planes,), minval=0.5,
                            maxval=1.5, dtype=jnp.float32)

    out = basic_block(x_nhwc, w1, g1, be1, m1, v1, w2, g2, be2, m2, v2)
    out = jax.block_until_ready(out)

    ref = basic_block_reference(x_nhwc, w1, g1, be1, m1, v1,
                                w2, g2, be2, m2, v2)
    # bf16 MXU operands -> relaxed tolerance vs the f32 reference.
    np.testing.assert_allclose(np.asarray(out), np.asarray(ref),
                               rtol=3e-2, atol=3e-2)

    # Output in PyTorch layout would be jnp.transpose(out, (0, 3, 1, 2)).
    print("KERNEL_OK")
</pallas_src>

<mosaic_0001>
module attributes {stable_mosaic.version = 11 : i64} {
  func.func @basic_block_kernel(%arg0: i32, %arg1: memref<1x16x128xf32, #tpu.memory_space<vmem>>, %arg2: memref<3x128x128xbf16, #tpu.memory_space<vmem>>, %arg3: memref<1x128xf32, #tpu.memory_space<vmem>>, %arg4: memref<1x128xf32, #tpu.memory_space<vmem>>, %arg5: memref<3x128x128xbf16, #tpu.memory_space<vmem>>, %arg6: memref<1x128xf32, #tpu.memory_space<vmem>>, %arg7: memref<1x128xf32, #tpu.memory_space<vmem>>, %arg8: memref<1x16x128xf32, #tpu.memory_space<vmem>>, %arg9: memref<18x128xf32, #tpu.memory_space<vmem>>, %arg10: memref<18x128xf32, #tpu.memory_space<vmem>>) attributes {dimension_semantics = [#tpu.dimension_semantics<parallel>], iteration_bounds = array<i64: 2>, scalar_prefetch = 0 : i64, scratch_operands = 2 : i64, tpu.core_type = #tpu.core_type<tc>, window_params = [{transform_indices = @transform_0, window_bounds = array<i64: 1, 16, 128>}, {pipeline_mode = #tpu.pipeline_mode<synchronous>, transform_indices = @transform_1, window_bounds = array<i64: 3, 128, 128>}, {pipeline_mode = #tpu.pipeline_mode<synchronous>, transform_indices = @transform_2, window_bounds = array<i64: 1, 128>}, {pipeline_mode = #tpu.pipeline_mode<synchronous>, transform_indices = @transform_3, window_bounds = array<i64: 1, 128>}, {pipeline_mode = #tpu.pipeline_mode<synchronous>, transform_indices = @transform_4, window_bounds = array<i64: 3, 128, 128>}, {pipeline_mode = #tpu.pipeline_mode<synchronous>, transform_indices = @transform_5, window_bounds = array<i64: 1, 128>}, {pipeline_mode = #tpu.pipeline_mode<synchronous>, transform_indices = @transform_6, window_bounds = array<i64: 1, 128>}, {transform_indices = @transform_7, window_bounds = array<i64: 1, 16, 128>}]} {
    %cst = arith.constant 0.000000e+00 : f32
    %0 = vector.broadcast %cst : f32 to vector<1x128xf32>
    %cst_0 = arith.constant 0.000000e+00 : f32
    %1 = vector.broadcast %cst_0 : f32 to vector<1x128xf32>
    %c0 = arith.constant 0 : index
    %c0_1 = arith.constant 0 : index
    %2 = vector.load %arg9[%c0, %c0_1] : memref<18x128xf32, #tpu.memory_space<vmem>>, vector<1x128xf32>
    tpu.vector_store %arg9[%c0, %c0_1], %0 {strides = array<i32>} : memref<18x128xf32, #tpu.memory_space<vmem>>, vector<1x128xf32>,
    %c17 = arith.constant 17 : index
    %c0_2 = arith.constant 0 : index
    %3 = vector.load %arg9[%c17, %c0_2] : memref<18x128xf32, #tpu.memory_space<vmem>>, vector<1x128xf32>
    tpu.vector_store %arg9[%c17, %c0_2], %0 {strides = array<i32>} : memref<18x128xf32, #tpu.memory_space<vmem>>, vector<1x128xf32>,
    %c0_3 = arith.constant 0 : index
    %c0_4 = arith.constant 0 : index
    %4 = vector.load %arg10[%c0_3, %c0_4] : memref<18x128xf32, #tpu.memory_space<vmem>>, vector<1x128xf32>
    tpu.vector_store %arg10[%c0_3, %c0_4], %1 {strides = array<i32>} : memref<18x128xf32, #tpu.memory_space<vmem>>, vector<1x128xf32>,
    %c17_5 = arith.constant 17 : index
    %c0_6 = arith.constant 0 : index
    %5 = vector.load %arg10[%c17_5, %c0_6] : memref<18x128xf32, #tpu.memory_space<vmem>>, vector<1x128xf32>
    tpu.vector_store %arg10[%c17_5, %c0_6], %1 {strides = array<i32>} : memref<18x128xf32, #tpu.memory_space<vmem>>, vector<1x128xf32>,
    %c0_7 = arith.constant 0 : index
    %c0_8 = arith.constant 0 : index
    %c0_9 = arith.constant 0 : index
    %6 = vector.load %arg1[%c0_7, %c0_8, %c0_9] : memref<1x16x128xf32, #tpu.memory_space<vmem>>, vector<1x16x128xf32>
    %7 = vector.shape_cast %6 : vector<1x16x128xf32> to vector<16x128xf32>
    %c1 = arith.constant 1 : index
    %c0_10 = arith.constant 0 : index
    %8 = vector.load %arg9[%c1, %c0_10] : memref<18x128xf32, #tpu.memory_space<vmem>>, vector<16x128xf32>
    tpu.vector_store %arg9[%c1, %c0_10], %7 {strides = array<i32>} : memref<18x128xf32, #tpu.memory_space<vmem>>, vector<16x128xf32>,
    %cst_11 = arith.constant 0.000000e+00 : f32
    %9 = vector.broadcast %cst_11 : f32 to vector<16x128xf32>
    %c0_12 = arith.constant 0 : index
    %c0_13 = arith.constant 0 : index
    %10 = vector.load %arg9[%c0_12, %c0_13] : memref<18x128xf32, #tpu.memory_space<vmem>>, vector<16x128xf32>
    %11 = arith.truncf %10 : vector<16x128xf32> to vector<16x128xbf16>
    %c0_14 = arith.constant 0 : index
    %c0_15 = arith.constant 0 : index
    %c0_16 = arith.constant 0 : index
    %12 = vector.load %arg2[%c0_14, %c0_15, %c0_16] : memref<3x128x128xbf16, #tpu.memory_space<vmem>>, vector<1x128x128xbf16>
    %13 = vector.shape_cast %12 : vector<1x128x128xbf16> to vector<128x128xbf16>
    %cst_17 = arith.constant dense<0.000000e+00> : vector<16x128xf32>
    %14 = tpu.matmul %11, %13, %cst_17 {dimension_numbers = #tpu.dot_dimension_numbers<[1], [0], [0], [1], [0, 0, 1, 1], [], []>} : vector<16x128xbf16>, vector<128x128xbf16>, vector<16x128xf32> -> vector<16x128xf32>
    %15 = arith.addf %9, %14 : vector<16x128xf32>
    %c1_18 = arith.constant 1 : index
    %c0_19 = arith.constant 0 : index
    %16 = vector.load %arg9[%c1_18, %c0_19] : memref<18x128xf32, #tpu.memory_space<vmem>>, vector<16x128xf32>
    %17 = arith.truncf %16 : vector<16x128xf32> to vector<16x128xbf16>
    %c1_20 = arith.constant 1 : index
    %c0_21 = arith.constant 0 : index
    %c0_22 = arith.constant 0 : index
    %18 = vector.load %arg2[%c1_20, %c0_21, %c0_22] : memref<3x128x128xbf16, #tpu.memory_space<vmem>>, vector<1x128x128xbf16>
    %19 = vector.shape_cast %18 : vector<1x128x128xbf16> to vector<128x128xbf16>
    %cst_23 = arith.constant dense<0.000000e+00> : vector<16x128xf32>
    %20 = tpu.matmul %17, %19, %cst_23 {dimension_numbers = #tpu.dot_dimension_numbers<[1], [0], [0], [1], [0, 0, 1, 1], [], []>} : vector<16x128xbf16>, vector<128x128xbf16>, vector<16x128xf32> -> vector<16x128xf32>
    %21 = arith.addf %15, %20 : vector<16x128xf32>
    %c2 = arith.constant 2 : index
    %c0_24 = arith.constant 0 : index
    %22 = vector.load %arg9[%c2, %c0_24] : memref<18x128xf32, #tpu.memory_space<vmem>>, vector<16x128xf32>
    %23 = arith.truncf %22 : vector<16x128xf32> to vector<16x128xbf16>
    %c2_25 = arith.constant 2 : index
    %c0_26 = arith.constant 0 : index
    %c0_27 = arith.constant 0 : index
    %24 = vector.load %arg2[%c2_25, %c0_26, %c0_27] : memref<3x128x128xbf16, #tpu.memory_space<vmem>>, vector<1x128x128xbf16>
    %25 = vector.shape_cast %24 : vector<1x128x128xbf16> to vector<128x128xbf16>
    %cst_28 = arith.constant dense<0.000000e+00> : vector<16x128xf32>
    %26 = tpu.matmul %23, %25, %cst_28 {dimension_numbers = #tpu.dot_dimension_numbers<[1], [0], [0], [1], [0, 0, 1, 1], [], []>} : vector<16x128xbf16>, vector<128x128xbf16>, vector<16x128xf32> -> vector<16x128xf32>
    %27 = arith.addf %21, %26 : vector<16x128xf32>
    %c0_29 = arith.constant 0 : index
    %c0_30 = arith.constant 0 : index
    %28 = vector.load %arg3[%c0_29, %c0_30] : memref<1x128xf32, #tpu.memory_space<vmem>>, vector<1x128xf32>
    %29 = vector.broadcast %28 : vector<1x128xf32> to vector<16x128xf32>
    %30 = arith.mulf %27, %29 : vector<16x128xf32>
    %c0_31 = arith.constant 0 : index
    %c0_32 = arith.constant 0 : index
    %31 = vector.load %arg4[%c0_31, %c0_32] : memref<1x128xf32, #tpu.memory_space<vmem>>, vector<1x128xf32>
    %32 = vector.broadcast %31 : vector<1x128xf32> to vector<16x128xf32>
    %33 = arith.addf %30, %32 : vector<16x128xf32>
    %cst_33 = arith.constant 0.000000e+00 : f32
    %34 = vector.broadcast %cst_33 : f32 to vector<16x128xf32>
    %35 = arith.maximumf %33, %34 : vector<16x128xf32>
    %c1_34 = arith.constant 1 : index
    %c0_35 = arith.constant 0 : index
    %36 = vector.load %arg10[%c1_34, %c0_35] : memref<18x128xf32, #tpu.memory_space<vmem>>, vector<16x128xf32>
    tpu.vector_store %arg10[%c1_34, %c0_35], %35 {strides = array<i32>} : memref<18x128xf32, #tpu.memory_space<vmem>>, vector<16x128xf32>,
    %cst_36 = arith.constant 0.000000e+00 : f32
    %37 = vector.broadcast %cst_36 : f32 to vector<16x128xf32>
    %c0_37 = arith.constant 0 : index
    %c0_38 = arith.constant 0 : index
    %38 = vector.load %arg10[%c0_37, %c0_38] : memref<18x128xf32, #tpu.memory_space<vmem>>, vector<16x128xf32>
    %39 = arith.truncf %38 : vector<16x128xf32> to vector<16x128xbf16>
    %c0_39 = arith.constant 0 : index
    %c0_40 = arith.constant 0 : index
    %c0_41 = arith.constant 0 : index
    %40 = vector.load %arg5[%c0_39, %c0_40, %c0_41] : memref<3x128x128xbf16, #tpu.memory_space<vmem>>, vector<1x128x128xbf16>
    %41 = vector.shape_cast %40 : vector<1x128x128xbf16> to vector<128x128xbf16>
    %cst_42 = arith.constant dense<0.000000e+00> : vector<16x128xf32>
    %42 = tpu.matmul %39, %41, %cst_42 {dimension_numbers = #tpu.dot_dimension_numbers<[1], [0], [0], [1], [0, 0, 1, 1], [], []>} : vector<16x128xbf16>, vector<128x128xbf16>, vector<16x128xf32> -> vector<16x128xf32>
    %43 = arith.addf %37, %42 : vector<16x128xf32>
    %c1_43 = arith.constant 1 : index
    %c0_44 = arith.constant 0 : index
    %44 = vector.load %arg10[%c1_43, %c0_44] : memref<18x128xf32, #tpu.memory_space<vmem>>, vector<16x128xf32>
    %45 = arith.truncf %44 : vector<16x128xf32> to vector<16x128xbf16>
    %c1_45 = arith.constant 1 : index
    %c0_46 = arith.constant 0 : index
    %c0_47 = arith.constant 0 : index
    %46 = vector.load %arg5[%c1_45, %c0_46, %c0_47] : memref<3x128x128xbf16, #tpu.memory_space<vmem>>, vector<1x128x128xbf16>
    %47 = vector.shape_cast %46 : vector<1x128x128xbf16> to vector<128x128xbf16>
    %cst_48 = arith.constant dense<0.000000e+00> : vector<16x128xf32>
    %48 = tpu.matmul %45, %47, %cst_48 {dimension_numbers = #tpu.dot_dimension_numbers<[1], [0], [0], [1], [0, 0, 1, 1], [], []>} : vector<16x128xbf16>, vector<128x128xbf16>, vector<16x128xf32> -> vector<16x128xf32>
    %49 = arith.addf %43, %48 : vector<16x128xf32>
    %c2_49 = arith.constant 2 : index
    %c0_50 = arith.constant 0 : index
    %50 = vector.load %arg10[%c2_49, %c0_50] : memref<18x128xf32, #tpu.memory_space<vmem>>, vector<16x128xf32>
    %51 = arith.truncf %50 : vector<16x128xf32> to vector<16x128xbf16>
    %c2_51 = arith.constant 2 : index
    %c0_52 = arith.constant 0 : index
    %c0_53 = arith.constant 0 : index
    %52 = vector.load %arg5[%c2_51, %c0_52, %c0_53] : memref<3x128x128xbf16, #tpu.memory_space<vmem>>, vector<1x128x128xbf16>
    %53 = vector.shape_cast %52 : vector<1x128x128xbf16> to vector<128x128xbf16>
    %cst_54 = arith.constant dense<0.000000e+00> : vector<16x128xf32>
    %54 = tpu.matmul %51, %53, %cst_54 {dimension_numbers = #tpu.dot_dimension_numbers<[1], [0], [0], [1], [0, 0, 1, 1], [], []>} : vector<16x128xbf16>, vector<128x128xbf16>, vector<16x128xf32> -> vector<16x128xf32>
    %55 = arith.addf %49, %54 : vector<16x128xf32>
    %c0_55 = arith.constant 0 : index
    %c0_56 = arith.constant 0 : index
    %56 = vector.load %arg6[%c0_55, %c0_56] : memref<1x128xf32, #tpu.memory_space<vmem>>, vector<1x128xf32>
    %57 = vector.broadcast %56 : vector<1x128xf32> to vector<16x128xf32>
    %58 = arith.mulf %55, %57 : vector<16x128xf32>
    %c0_57 = arith.constant 0 : index
    %c0_58 = arith.constant 0 : index
    %59 = vector.load %arg7[%c0_57, %c0_58] : memref<1x128xf32, #tpu.memory_space<vmem>>, vector<1x128xf32>
    %60 = vector.broadcast %59 : vector<1x128xf32> to vector<16x128xf32>
    %61 = arith.addf %58, %60 : vector<16x128xf32>
    %62 = arith.addf %61, %7 : vector<16x128xf32>
    %cst_59 = arith.constant 0.000000e+00 : f32
    %63 = vector.broadcast %cst_59 : f32 to vector<16x128xf32>
    %64 = arith.maximumf %62, %63 : vector<16x128xf32>
    %c0_60 = arith.constant 0 : index
    %c0_61 = arith.constant 0 : index
    %c0_62 = arith.constant 0 : index
    %65 = vector.load %arg8[%c0_60, %c0_61, %c0_62] : memref<1x16x128xf32, #tpu.memory_space<vmem>>, vector<1x16x128xf32>
    %66 = vector.shape_cast %65 : vector<1x16x128xf32> to vector<16x128xf32>
    %67 = vector.shape_cast %64 : vector<16x128xf32> to vector<1x16x128xf32>
    tpu.vector_store %arg8[%c0_60, %c0_61, %c0_62], %67 {strides = array<i32>} : memref<1x16x128xf32, #tpu.memory_space<vmem>>, vector<1x16x128xf32>,
    return
  }
  func.func @transform_0(%arg0: i32) -> (i32, i32, i32) {
    %c0_i32 = arith.constant 0 : i32
    %c0_i32_0 = arith.constant 0 : i32
    %c0_i32_1 = arith.constant 0 : i32
    return %arg0, %c0_i32, %c0_i32_0 : i32, i32, i32
  }
  func.func @transform_1(%arg0: i32) -> (i32, i32, i32) {
    %c0_i32 = arith.constant 0 : i32
    %c0_i32_0 = arith.constant 0 : i32
    %c0_i32_1 = arith.constant 0 : i32
    %c0_i32_2 = arith.constant 0 : i32
    return %c0_i32, %c0_i32_0, %c0_i32_1 : i32, i32, i32
  }
  func.func @transform_2(%arg0: i32) -> (i32, i32) {
    %c0_i32 = arith.constant 0 : i32
    %c0_i32_0 = arith.constant 0 : i32
    %c0_i32_1 = arith.constant 0 : i32
    return %c0_i32, %c0_i32_0 : i32, i32
  }
  func.func @transform_3(%arg0: i32) -> (i32, i32) {
    %c0_i32 = arith.constant 0 : i32
    %c0_i32_0 = arith.constant 0 : i32
    %c0_i32_1 = arith.constant 0 : i32
    return %c0_i32, %c0_i32_0 : i32, i32
  }
  func.func @transform_4(%arg0: i32) -> (i32, i32, i32) {
    %c0_i32 = arith.constant 0 : i32
    %c0_i32_0 = arith.constant 0 : i32
    %c0_i32_1 = arith.constant 0 : i32
    %c0_i32_2 = arith.constant 0 : i32
    return %c0_i32, %c0_i32_0, %c0_i32_1 : i32, i32, i32
  }
  func.func @transform_5(%arg0: i32) -> (i32, i32) {
    %c0_i32 = arith.constant 0 : i32
    %c0_i32_0 = arith.constant 0 : i32
    %c0_i32_1 = arith.constant 0 : i32
    return %c0_i32, %c0_i32_0 : i32, i32
  }
  func.func @transform_6(%arg0: i32) -> (i32, i32) {
    %c0_i32 = arith.constant 0 : i32
    %c0_i32_0 = arith.constant 0 : i32
    %c0_i32_1 = arith.constant 0 : i32
    return %c0_i32, %c0_i32_0 : i32, i32
  }
  func.func @transform_7(%arg0: i32) -> (i32, i32, i32) {
    %c0_i32 = arith.constant 0 : i32
    %c0_i32_0 = arith.constant 0 : i32
    %c0_i32_1 = arith.constant 0 : i32
    return %arg0, %c0_i32, %c0_i32_0 : i32, i32, i32
  }
}

</mosaic_0001>

<llo_original>
// kernel: tpu_custom_call.1
$region0: #{tpu_custom_call.1}
  #allocation0 [shape = 'u32[]', space=smem, size = 0x4, offset = 0x4, fixed_abs, tag = 'smem constant byte address 0x4 - core index']
  #allocation1 [shape = 'u32[144,128]{1,0:T(1,128)}', space=vmem, size = 0x12000, scoped, tag = 'internal scratch']
  #allocation2 [shape = 'f32[18,128]{1,0:T(8,128)}', space=vmem, size = 0x3000, scoped, tag = 'scratch operand']
  #allocation3 [shape = 'f32[18,128]{1,0:T(8,128)}', space=vmem, size = 0x3000, scoped, tag = 'scratch operand']
  %s0 = inlined_call_operand.hbm [shape: f32[2,16,128], index: 0, kind: input, shape index: {}]
  %s1 = inlined_call_operand.hbm [shape: bf16[3,128,128], index: 1, kind: input, shape index: {}]
  %s2 = inlined_call_operand.vmem [shape: f32[1,128], index: 2, kind: input, shape index: {}]
  %s3 = inlined_call_operand.vmem [shape: f32[1,128], index: 3, kind: input, shape index: {}]
  %s4 = inlined_call_operand.hbm [shape: bf16[3,128,128], index: 4, kind: input, shape index: {}]
  %s5 = inlined_call_operand.vmem [shape: f32[1,128], index: 5, kind: input, shape index: {}]
  %s6 = inlined_call_operand.vmem [shape: f32[1,128], index: 6, kind: input, shape index: {}]
  %s7 = inlined_call_operand.hbm [shape: f32[2,16,128], index: 7, kind: output, shape index: {}]
  %s8 = sld [smem:[#allocation0]]
  $region73: #{tpu_custom_call.1} parent=0
    _
  %s10 = ssub.s32 1, %s8
  %s11 = scalar_select 0, %s10, %s8
  $region1: #{tpu_custom_call.1} parent=0
    #allocation4 [shape = 'u8[16384]{0}', space=vmem, size = 0x4000, scoped, tag = 'input window, operand 0']
    #allocation5 [shape = 's32[2]{0}', space=sflag, size = 0x8, scoped, tag = 'scoped memory for tpu_custom_call.1']
    #allocation6 [shape = 's32[2]{0}', space=sflag, size = 0x8, scoped, tag = 'scoped memory for tpu_custom_call.1']
    #allocation7 [shape = 'u8[98304]{0}', space=vmem, size = 0x18000, scoped, tag = 'input window, operand 1, single buffered']
    #allocation8 [shape = 's32[1]{0}', space=sflag, size = 0x4, scoped, tag = 'scoped memory for tpu_custom_call.1']
    #allocation9 [shape = 'u8[98304]{0}', space=vmem, size = 0x18000, scoped, tag = 'input window, operand 4, single buffered']
    #allocation10 [shape = 'u8[16384]{0}', space=vmem, size = 0x4000, scoped, tag = 'output window, operand 0']
    %12 = vsyncpa [#allocation5], 0
    %s13 = scalar_lea.sflag [#allocation5], 1
    %14 = vsyncpa %s13, 0
    %15 = vsyncpa [#allocation8], 0
    %16 = vsyncpa [#allocation6], 0
    %s17 = scalar_lea.sflag [#allocation6], 1
    %18 = vsyncpa %s17, 0
    loop: start=0, step=1, limit=4
    $region2: #{tpu_custom_call.1} parent=1 // loop_pre_header
      _
    $region3: #{tpu_custom_call.1} parent=1 // loop_header
      %s20 = sphi 0, %s24
      %p21 = scmp.ge.s32.totalorder %s20, 4
      %s30 = sphi 0, %s32
      %s33 = sphi 0, %s30
      %s34 = sphi 0, %s33
      %s50 = sphi 0, %s34
      %s54 = sphi 0, %s54
      %s56 = sphi 0, %s54
      %s57 = sphi 0, %s56
      %s71 = sphi 0, %s57
      %s75 = sphi 0, %s75
      %s77 = sphi 0, %s75
      %s78 = sphi 0, %s77
      %s92 = sphi 0, %s78
      %s96 = sphi 0, %s96
      %s98 = sphi 0, %s96
      %s99 = sphi 0, %s98
      %s113 = sphi 0, %s99
      %s117 = sphi 0, %s117
      %s119 = sphi 0, %s117
      %s120 = sphi 0, %s119
      %s134 = sphi 0, %s120
      %s138 = sphi 0, %s138
      %s140 = sphi 0, %s138
      %s141 = sphi 0, %s140
      %s155 = sphi 0, %s141
      %s159 = sphi 0, %s159
      %s161 = sphi 0, %s159
      %s162 = sphi 0, %s161
      %s176 = sphi 0, %s162
      %s182 = sphi 0, %s184
      %s185 = sphi 0, %s182
      %s186 = sphi 0, %s185
      %s202 = sphi 0, %s186
    $region4: #{tpu_custom_call.1} parent=1 // loop_header_branch
      %23 = sbr.rel (%p21) target = $region8
    $region5: #{tpu_custom_call.1} parent=1 // loop_body
      %s25 = ssub.s32 %s20, 1
      %s26 = ssub.s32 %s20, 2
      %s27 = sadd.s32 %s20, 1
      %s28 = ssub.s32 %s20, %s27
      %p29 = scmp.eq.s32.totalorder %s28, 0
      %s31 = sadd.s32 %s30, 1
      %s32 = scalar_select %p29, %s30, %s31
      %p35 = pneg %p29
      %p36 = scmp.eq.s32.totalorder %s20, 1
      %p37 = por %p35, %p36
      %p38 = scmp.ne.s32.totalorder %s30, %s33
      %p39 = scmp.eq.s32.totalorder %s20, 0
      %p40 = por %p38, %p39
      %p41 = scmp.ne.s32.totalorder %s30, %s33
      %p42 = scmp.eq.s32.totalorder %s25, 1
      %p43 = por %p41, %p42
      %p44 = scmp.ne.s32.totalorder %s33, %s34
      %p45 = scmp.eq.s32.totalorder %s25, 0
      %p46 = por %p44, %p45
      %p47 = scmp.ne.s32.totalorder %s33, %s34
      %p48 = scmp.eq.s32.totalorder %s26, 1
      %p49 = por %p47, %p48
      %p51 = scmp.ne.s32.totalorder %s34, %s50
      %p52 = scmp.eq.s32.totalorder %s26, 0
      %p53 = por %p51, %p52
      %s55 = sadd.s32 %s54, 1
      %p58 = scmp.eq.s32.totalorder %s20, 1
      %p59 = scmp.ne.s32.totalorder %s54, %s56
      %p60 = scmp.eq.s32.totalorder %s20, 0
      %p61 = por %p59, %p60
      %p62 = scmp.ne.s32.totalorder %s54, %s56
      %p63 = scmp.eq.s32.totalorder %s25, 1
      %p64 = por %p62, %p63
      %p65 = scmp.ne.s32.totalorder %s56, %s57
      %p66 = scmp.eq.s32.totalorder %s25, 0
      %p67 = por %p65, %p66
      %p68 = scmp.ne.s32.totalorder %s56, %s57
      %p69 = scmp.eq.s32.totalorder %s26, 1
      %p70 = por %p68, %p69
      %p72 = scmp.ne.s32.totalorder %s57, %s71
      %p73 = scmp.eq.s32.totalorder %s26, 0
      %p74 = por %p72, %p73
      %s76 = sadd.s32 %s75, 1
      %p79 = scmp.eq.s32.totalorder %s20, 1
      %p80 = scmp.ne.s32.totalorder %s75, %s77
      %p81 = scmp.eq.s32.totalorder %s20, 0
      %p82 = por %p80, %p81
      %p83 = scmp.ne.s32.totalorder %s75, %s77
      %p84 = scmp.eq.s32.totalorder %s25, 1
      %p85 = por %p83, %p84
      %p86 = scmp.ne.s32.totalorder %s77, %s78
      %p87 = scmp.eq.s32.totalorder %s25, 0
      %p88 = por %p86, %p87
      %p89 = scmp.ne.s32.totalorder %s77, %s78
      %p90 = scmp.eq.s32.totalorder %s26, 1
      %p91 = por %p89, %p90
      %p93 = scmp.ne.s32.totalorder %s78, %s92
      %p94 = scmp.eq.s32.totalorder %s26, 0
      %p95 = por %p93, %p94
      %s97 = sadd.s32 %s96, 1
      %p100 = scmp.eq.s32.totalorder %s20, 1
      %p101 = scmp.ne.s32.totalorder %s96, %s98
      %p102 = scmp.eq.s32.totalorder %s20, 0
      %p103 = por %p101, %p102
      %p104 = scmp.ne.s32.totalorder %s96, %s98
      %p105 = scmp.eq.s32.totalorder %s25, 1
      %p106 = por %p104, %p105
      %p107 = scmp.ne.s32.totalorder %s98, %s99
      %p108 = scmp.eq.s32.totalorder %s25, 0
      %p109 = por %p107, %p108
      %p110 = scmp.ne.s32.totalorder %s98, %s99
      %p111 = scmp.eq.s32.totalorder %s26, 1
      %p112 = por %p110, %p111
      %p114 = scmp.ne.s32.totalorder %s99, %s113
      %p115 = scmp.eq.s32.totalorder %s26, 0
      %p116 = por %p114, %p115
      %s118 = sadd.s32 %s117, 1
      %p121 = scmp.eq.s32.totalorder %s20, 1
      %p122 = scmp.ne.s32.totalorder %s117, %s119
      %p123 = scmp.eq.s32.totalorder %s20, 0
      %p124 = por %p122, %p123
      %p125 = scmp.ne.s32.totalorder %s117, %s119
      %p126 = scmp.eq.s32.totalorder %s25, 1
      %p127 = por %p125, %p126
      %p128 = scmp.ne.s32.totalorder %s119, %s120
      %p129 = scmp.eq.s32.totalorder %s25, 0
      %p130 = por %p128, %p129
      %p131 = scmp.ne.s32.totalorder %s119, %s120
      %p132 = scmp.eq.s32.totalorder %s26, 1
      %p133 = por %p131, %p132
      %p135 = scmp.ne.s32.totalorder %s120, %s134
      %p136 = scmp.eq.s32.totalorder %s26, 0
      %p137 = por %p135, %p136
      %s139 = sadd.s32 %s138, 1
      %p142 = scmp.eq.s32.totalorder %s20, 1
      %p143 = scmp.ne.s32.totalorder %s138, %s140
      %p144 = scmp.eq.s32.totalorder %s20, 0
      %p145 = por %p143, %p144
      %p146 = scmp.ne.s32.totalorder %s138, %s140
      %p147 = scmp.eq.s32.totalorder %s25, 1
      %p148 = por %p146, %p147
      %p149 = scmp.ne.s32.totalorder %s140, %s141
      %p150 = scmp.eq.s32.totalorder %s25, 0
      %p151 = por %p149, %p150
      %p152 = scmp.ne.s32.totalorder %s140, %s141
      %p153 = scmp.eq.s32.totalorder %s26, 1
      %p154 = por %p152, %p153
      %p156 = scmp.ne.s32.totalorder %s141, %s155
      %p157 = scmp.eq.s32.totalorder %s26, 0
      %p158 = por %p156, %p157
      %s160 = sadd.s32 %s159, 1
      %p163 = scmp.eq.s32.totalorder %s20, 1
      %p164 = scmp.ne.s32.totalorder %s159, %s161
      %p165 = scmp.eq.s32.totalorder %s20, 0
      %p166 = por %p164, %p165
      %p167 = scmp.ne.s32.totalorder %s159, %s161
      %p168 = scmp.eq.s32.totalorder %s25, 1
      %p169 = por %p167, %p168
      %p170 = scmp.ne.s32.totalorder %s161, %s162
      %p171 = scmp.eq.s32.totalorder %s25, 0
      %p172 = por %p170, %p171
      %p173 = scmp.ne.s32.totalorder %s161, %s162
      %p174 = scmp.eq.s32.totalorder %s26, 1
      %p175 = por %p173, %p174
      %p177 = scmp.ne.s32.totalorder %s162, %s176
      %p178 = scmp.eq.s32.totalorder %s26, 0
      %p179 = por %p177, %p178
      %s180 = ssub.s32 %s20, %s27
      %p181 = scmp.eq.s32.totalorder %s180, 0
      %s183 = sadd.s32 %s182, 1
      %s184 = scalar_select %p181, %s182, %s183
      %p187 = pneg %p181
      %p188 = scmp.eq.s32.totalorder %s20, 1
      %p189 = por %p187, %p188
      %p190 = scmp.ne.s32.totalorder %s182, %s185
      %p191 = scmp.eq.s32.totalorder %s20, 0
      %p192 = por %p190, %p191
      %p193 = scmp.ne.s32.totalorder %s182, %s185
      %p194 = scmp.eq.s32.totalorder %s25, 1
      %p195 = por %p193, %p194
      %p196 = scmp.ne.s32.totalorder %s185, %s186
      %p197 = scmp.eq.s32.totalorder %s25, 0
      %p198 = por %p196, %p197
      %p199 = scmp.ne.s32.totalorder %s185, %s186
      %p200 = scmp.eq.s32.totalorder %s26, 1
      %p201 = por %p199, %p200
      %p203 = scmp.ne.s32.totalorder %s186, %s202
      %p204 = scmp.eq.s32.totalorder %s26, 0
      %p205 = por %p203, %p204
      %p206 = scmp.le.s32.totalorder 1, %s20
      %p207 = scmp.lt.s32.totalorder %s20, 3
      %p208 = pnand %p206, %p207
      %p209 = pneg %p208
      // Predicated region
      $region9: #{tpu_custom_call.1} parent=5 // pred_check
        _
      $region10: #{tpu_custom_call.1} parent=5 // pred_check_branch
        %211 = sbr.rel (%p208) target = $region12
      $region11: #{tpu_custom_call.1} parent=5 // pred_region
        %s212 = ssub.s32 %s20, 1
        // Predicated region
        $region13: #{tpu_custom_call.1} parent=11 // pred_check
          %p213 = pneg %p67
        $region14: #{tpu_custom_call.1} parent=11 // pred_check_branch
          %215 = sbr.rel (%p213) target = $region16
        $region15: #{tpu_custom_call.1} parent=11 // pred_region
          %s217 = ssub.s32 3072, 3072
          %218 = vsyncadd [#allocation8], %s217
          %s219 = sshll.u32 [#allocation7], 4
          %s220 = int_to_ptr.vmem [resolvable:$true] %s219
          %225 = dma.hbm_to_vmem [thread:$0]  %s1, 3072, %s220, [#allocation8], 64, 64, 4
        $region16: #{tpu_custom_call.1} parent=11 // pred_fallthru
          _
        // Predicated region
        $region17: #{tpu_custom_call.1} parent=11 // pred_check
          %p226 = pneg %p88
        $region18: #{tpu_custom_call.1} parent=11 // pred_check_branch
          %228 = sbr.rel (%p226) target = $region20
        $region19: #{tpu_custom_call.1} parent=11 // pred_region
          _
        $region20: #{tpu_custom_call.1} parent=11 // pred_fallthru
          _
        // Predicated region
        $region21: #{tpu_custom_call.1} parent=11 // pred_check
          %p229 = pneg %p109
        $region22: #{tpu_custom_call.1} parent=11 // pred_check_branch
          %231 = sbr.rel (%p229) target = $region24
        $region23: #{tpu_custom_call.1} parent=11 // pred_region
          _
        $region24: #{tpu_custom_call.1} parent=11 // pred_fallthru
          _
        // Predicated region
        $region25: #{tpu_custom_call.1} parent=11 // pred_check
          %p232 = pneg %p130
        $region26: #{tpu_custom_call.1} parent=11 // pred_check_branch
          %234 = sbr.rel (%p232) target = $region28
        $region27: #{tpu_custom_call.1} parent=11 // pred_region
          %s236 = ssub.s32 3072, 3072
          %237 = vsyncadd [#allocation8], %s236
          %s238 = sshll.u32 [#allocation9], 4
          %s239 = int_to_ptr.vmem [resolvable:$true] %s238
          %244 = dma.hbm_to_vmem [thread:$0]  %s4, 3072, %s239, [#allocation8], 64, 64, 4
        $region28: #{tpu_custom_call.1} parent=11 // pred_fallthru
          _
        // Predicated region
        $region29: #{tpu_custom_call.1} parent=11 // pred_check
          %p245 = pneg %p151
        $region30: #{tpu_custom_call.1} parent=11 // pred_check_branch
          %247 = sbr.rel (%p245) target = $region32
        $region31: #{tpu_custom_call.1} parent=11 // pred_region
          _
        $region32: #{tpu_custom_call.1} parent=11 // pred_fallthru
          _
        // Predicated region
        $region33: #{tpu_custom_call.1} parent=11 // pred_check
          %p248 = pneg %p172
        $region34: #{tpu_custom_call.1} parent=11 // pred_check_branch
          %250 = sbr.rel (%p248) target = $region36
        $region35: #{tpu_custom_call.1} parent=11 // pred_region
          _
        $region36: #{tpu_custom_call.1} parent=11 // pred_fallthru
          _
      $region12: #{tpu_custom_call.1} parent=5 // pred_fallthru
        _
      %p251 = scmp.lt.s32.totalorder %s20, 2
      // Predicated region
      $region37: #{tpu_custom_call.1} parent=5 // pred_check
        %p252 = pneg %p251
      $region38: #{tpu_custom_call.1} parent=5 // pred_check_branch
        %254 = sbr.rel (%p252) target = $region40
      $region39: #{tpu_custom_call.1} parent=5 // pred_region
        // Predicated region
        $region41: #{tpu_custom_call.1} parent=39 // pred_check
          %p255 = pneg %p40
        $region42: #{tpu_custom_call.1} parent=39 // pred_check_branch
          %257 = sbr.rel (%p255) target = $region44
        $region43: #{tpu_custom_call.1} parent=39 // pred_region
          %s258 = sand.u32 %s30, 1
          %s259 = scalar_lea.sflag [#allocation5], %s258
          %s260 = sand.u32 %s30, 1
          %s261 = smul.addr %s260, 16
          %s262 = scalar_lea.vmem [#allocation4], %s261
          %s264 = ssub.s32 256, 256
          %265 = vsyncadd %s259, %s264
          %s266 = smul.addr %s20, 2
          %s267 = smul.addr %s266, 128
          %s268 = scalar_lea.hbm %s0, %s267
          %s269 = sshll.u32 %s262, 4
          %s270 = int_to_ptr.vmem [resolvable:$true] %s269
          %275 = dma.hbm_to_vmem [thread:$0]  %s268, 256, %s270, %s259, 128, 128, 8
        $region44: #{tpu_custom_call.1} parent=39 // pred_fallthru
          _
      $region40: #{tpu_custom_call.1} parent=5 // pred_fallthru
        _
      %p276 = scmp.le.s32.totalorder 1, %s20
      %p277 = scmp.lt.s32.totalorder %s20, 3
      %p278 = pnand %p276, %p277
      %p279 = pneg %p278
      // Predicated region
      $region45: #{tpu_custom_call.1} parent=5 // pred_check
        _
      $region46: #{tpu_custom_call.1} parent=5 // pred_check_branch
        %281 = sbr.rel (%p278) target = $region48
      $region47: #{tpu_custom_call.1} parent=5 // pred_region
        %s282 = ssub.s32 %s20, 1
        %s283 = sand.u32 %s33, 1
        %s284 = scalar_lea.sflag [#allocation5], %s283
        %s285 = sand.u32 %s33, 1
        %s286 = smul.addr %s285, 16
        %s287 = scalar_lea.vmem [#allocation4], %s286
        // Predicated region
        $region49: #{tpu_custom_call.1} parent=47 // pred_check
          %p288 = pneg %p46
        $region50: #{tpu_custom_call.1} parent=47 // pred_check_branch
          %290 = sbr.rel (%p288) target = $region52
        $region51: #{tpu_custom_call.1} parent=47 // pred_region
          %291 = dma.done %s284, 256
        $region52: #{tpu_custom_call.1} parent=47 // pred_fallthru
          _
        // Predicated region
        $region53: #{tpu_custom_call.1} parent=47 // pred_check
          %p292 = pneg %p67
        $region54: #{tpu_custom_call.1} parent=47 // pred_check_branch
          %294 = sbr.rel (%p292) target = $region56
        $region55: #{tpu_custom_call.1} parent=47 // pred_region
          %295 = dma.done [#allocation8], 3072
        $region56: #{tpu_custom_call.1} parent=47 // pred_fallthru
          _
        // Predicated region
        $region57: #{tpu_custom_call.1} parent=47 // pred_check
          %p296 = pneg %p130
        $region58: #{tpu_custom_call.1} parent=47 // pred_check_branch
          %298 = sbr.rel (%p296) target = $region60
        $region59: #{tpu_custom_call.1} parent=47 // pred_region
          %299 = dma.done [#allocation8], 3072
        $region60: #{tpu_custom_call.1} parent=47 // pred_fallthru
          _
        %s300 = sand.u32 %s33, 1
        %s301 = scalar_lea.sflag [#allocation5], %s300
        %s302 = sand.u32 %s33, 1
        %s303 = smul.addr %s302, 16
        %s304 = scalar_lea.vmem [#allocation4], %s303
        %p305 = pneg %p46
        %p306 = pneg %p43
        %p307 = pneg %p67
        %p308 = pneg %p64
        %p309 = pneg %p88
        %p310 = pneg %p85
        %p311 = pneg %p109
        %p312 = pneg %p106
        %p313 = pneg %p130
        %p314 = pneg %p127
        %p315 = pneg %p151
        %p316 = pneg %p148
        %p317 = pneg %p172
        %p318 = pneg %p169
        %p319 = pneg %p198
        %p320 = pneg %p195
        %s321 = sand.u32 %s185, 1
        %s322 = scalar_lea.sflag [#allocation6], %s321
        %s323 = sand.u32 %s185, 1
        %s324 = smul.addr %s323, 16
        %s325 = scalar_lea.vmem [#allocation10], %s324
        %327 = vst [vmem:[#allocation2] sm:$0x1] 0.0
        %328 = vst [vmem:[#allocation2 + $0x11] sm:$0x1] 0.0
        %329 = vst [vmem:[#allocation3] sm:$0x1] 0.0
        %330 = vst [vmem:[#allocation3 + $0x11] sm:$0x1] 0.0
        %v331 = vld [vmem:[%s287] sm:$0xff]
        %v332 = vld [vmem:[%s287 + $0x8] sm:$0xff]
        %333 = vst [vmem:[#allocation2 + $0x1] sm:$0xff] %v331
        %334 = vst [vmem:[#allocation2 + $0x9] sm:$0xff] %v332
        %v335 = vld [vmem:[#allocation2] sm:$0xff]
        %v336 = vld [vmem:[#allocation2 + $0x8] sm:$0xff]
        %v337 = vpack.c.bf16 %v336, %v335
        %v338 = vld [vmem:[#allocation7] sm:$0xf]
        %v339 = vld [vmem:[#allocation7 + $0x4] sm:$0xf]
        %v340 = vld [vmem:[#allocation7 + $0x8] sm:$0xf]
        %v341 = vld [vmem:[#allocation7 + $0xc] sm:$0xf]
        %v342 = vld [vmem:[#allocation7 + $0x10] sm:$0xf]
        %v343 = vld [vmem:[#allocation7 + $0x14] sm:$0xf]
        %v344 = vld [vmem:[#allocation7 + $0x18] sm:$0xf]
        %v345 = vld [vmem:[#allocation7 + $0x1c] sm:$0xf]
        %v346 = vld [vmem:[#allocation7 + $0x20] sm:$0xf]
        %v347 = vld [vmem:[#allocation7 + $0x24] sm:$0xf]
        %v348 = vld [vmem:[#allocation7 + $0x28] sm:$0xf]
        %v349 = vld [vmem:[#allocation7 + $0x2c] sm:$0xf]
        %v350 = vld [vmem:[#allocation7 + $0x30] sm:$0xf]
        %v351 = vld [vmem:[#allocation7 + $0x34] sm:$0xf]
        %v352 = vld [vmem:[#allocation7 + $0x38] sm:$0xf]
        %v353 = vld [vmem:[#allocation7 + $0x3c] sm:$0xf]
        %v354 = vld [vmem:[#allocation2 + $0x1] sm:$0xff]
        %v355 = vld [vmem:[#allocation2 + $0x9] sm:$0xff]
        %v356 = vpack.c.bf16 %v355, %v354
        %s357 = scalar_lea.vmem [#allocation7], 64
        %v358 = vld [vmem:[%s357] sm:$0xf]
        %v359 = vld [vmem:[%s357 + $0x4] sm:$0xf]
        %v360 = vld [vmem:[%s357 + $0x8] sm:$0xf]
        %v361 = vld [vmem:[%s357 + $0xc] sm:$0xf]
        %v362 = vld [vmem:[%s357 + $0x10] sm:$0xf]
        %v363 = vld [vmem:[%s357 + $0x14] sm:$0xf]
        %v364 = vld [vmem:[%s357 + $0x18] sm:$0xf]
        %v365 = vld [vmem:[%s357 + $0x1c] sm:$0xf]
        %v366 = vld [vmem:[%s357 + $0x20] sm:$0xf]
        %v367 = vld [vmem:[%s357 + $0x24] sm:$0xf]
        %v368 = vld [vmem:[%s357 + $0x28] sm:$0xf]
        %v369 = vld [vmem:[%s357 + $0x2c] sm:$0xf]
        %v370 = vld [vmem:[%s357 + $0x30] sm:$0xf]
        %v371 = vld [vmem:[%s357 + $0x34] sm:$0xf]
        %v372 = vld [vmem:[%s357 + $0x38] sm:$0xf]
        %v373 = vld [vmem:[%s357 + $0x3c] sm:$0xf]
        %v390 = vunpack.c.l.b16 %v358
        %v391 = vunpack.c.l.b16 %v359
        %v392 = vunpack.c.l.b16 %v360
        %v393 = vunpack.c.l.b16 %v361
        %v394 = vunpack.c.l.b16 %v362
        %v395 = vunpack.c.l.b16 %v363
        %v396 = vunpack.c.l.b16 %v364
        %v397 = vunpack.c.l.b16 %v365
        %v398 = vunpack.c.l.b16 %v366
        %v399 = vunpack.c.l.b16 %v367
        %v400 = vunpack.c.l.b16 %v368
        %v401 = vunpack.c.l.b16 %v369
        %v402 = vunpack.c.l.b16 %v370
        %v403 = vunpack.c.l.b16 %v371
        %v404 = vunpack.c.l.b16 %v372
        %v405 = vunpack.c.l.b16 %v373
        %v406 = vpack.c.b16 %v391, %v390
        %v407 = vpack.c.b16 %v393, %v392
        %v408 = vpack.c.b16 %v395, %v394
        %v409 = vpack.c.b16 %v397, %v396
        %v410 = vpack.c.b16 %v399, %v398
        %v411 = vpack.c.b16 %v401, %v400
        %v412 = vpack.c.b16 %v403, %v402
        %v413 = vpack.c.b16 %v405, %v404
        %422 = vmatprep.subr.bf16.mxu0 0
        %423 = vmatpush1.bf16.msra.mxu0 %v406
        %424 = vmatprep.subr.bf16.mxu0 0
        %425 = vmatpush1.bf16.msra.mxu0 %v407
        %426 = vmatprep.subr.bf16.mxu0 0
        %427 = vmatpush1.bf16.msra.mxu0 %v408
        %428 = vmatprep.subr.bf16.mxu0 0
        %429 = vmatpush1.bf16.msra.mxu0 %v409
        %430 = vmatprep.subr.bf16.mxu0 0
        %431 = vmatpush1.bf16.msra.mxu0 %v410
        %432 = vmatprep.subr.bf16.mxu0 0
        %433 = vmatpush1.bf16.msra.mxu0 %v411
        %434 = vmatprep.subr.bf16.mxu0 0
        %435 = vmatpush1.bf16.msra.mxu0 %v412
        %436 = vmatprep.subr.bf16.mxu0 0
        %437 = vmatpush1.bf16.msra.mxu0 %v413
        %438 = vmatprep.subr.bf16.mxu0 0
        %439 = vmatpush1.bf16.msra.mxu0 0
        %440 = vmatprep.subr.bf16.mxu0 0
        %441 = vmatpush1.bf16.msra.mxu0 0
        %442 = vmatprep.subr.bf16.mxu0 0
        %443 = vmatpush1.bf16.msra.mxu0 0
        %444 = vmatprep.subr.bf16.mxu0 0
        %445 = vmatpush1.bf16.msra.mxu0 0
        %446 = vmatprep.subr.bf16.mxu0 0
        %447 = vmatpush1.bf16.msra.mxu0 0
        %448 = vmatprep.subr.bf16.mxu0 0
        %449 = vmatpush1.bf16.msra.mxu0 0
        %450 = vmatprep.subr.bf16.mxu0 0
        %451 = vmatpush1.bf16.msra.mxu0 0
        %452 = vmatprep.subr.bf16.mxu0 0
        %453 = vmatpush1.bf16.msra.mxu0 0
        %454 = vmatprep.mubr.bf16.mxu0 0
        %455 = vmatmul.mubr.bf16.gmra.mrb[0].mxu0 %v356
        %v456 = vpop.f32.mrb[0].mxu0
        %v457 = vadd.f32 0.0, %v456
        %v458 = vpop.f32.mrb[0].mxu0
        %v459 = vpop.f32.mrb[0].mxu0
        %v460 = vadd.f32 0.0, %v459
        %v461 = vpop.f32.mrb[0].mxu0
        %462 = vdwg.mxu0
        %v479 = vunpack.c.l.b16 %v338
        %v480 = vunpack.c.l.b16 %v339
        %v481 = vunpack.c.l.b16 %v340
        %v482 = vunpack.c.l.b16 %v341
        %v483 = vunpack.c.l.b16 %v342
        %v484 = vunpack.c.l.b16 %v343
        %v485 = vunpack.c.l.b16 %v344
        %v486 = vunpack.c.l.b16 %v345
        %v487 = vunpack.c.l.b16 %v346
        %v488 = vunpack.c.l.b16 %v347
        %v489 = vunpack.c.l.b16 %v348
        %v490 = vunpack.c.l.b16 %v349
        %v491 = vunpack.c.l.b16 %v350
        %v492 = vunpack.c.l.b16 %v351
        %v493 = vunpack.c.l.b16 %v352
        %v494 = vunpack.c.l.b16 %v353
        %v495 = vpack.c.b16 %v480, %v479
        %v496 = vpack.c.b16 %v482, %v481
        %v497 = vpack.c.b16 %v484, %v483
        %v498 = vpack.c.b16 %v486, %v485
        %v499 = vpack.c.b16 %v488, %v487
        %v500 = vpack.c.b16 %v490, %v489
        %v501 = vpack.c.b16 %v492, %v491
        %v502 = vpack.c.b16 %v494, %v493
        %511 = vmatprep.subr.bf16.mxu0 0
        %512 = vmatpush1.bf16.msra.mxu0 %v495
        %513 = vmatprep.subr.bf16.mxu0 0
        %514 = vmatpush1.bf16.msra.mxu0 %v496
        %515 = vmatprep.subr.bf16.mxu0 0
        %516 = vmatpush1.bf16.msra.mxu0 %v497
        %517 = vmatprep.subr.bf16.mxu0 0
        %518 = vmatpush1.bf16.msra.mxu0 %v498
        %519 = vmatprep.subr.bf16.mxu0 0
        %520 = vmatpush1.bf16.msra.mxu0 %v499
        %521 = vmatprep.subr.bf16.mxu0 0
        %522 = vmatpush1.bf16.msra.mxu0 %v500
        %523 = vmatprep.subr.bf16.mxu0 0
        %524 = vmatpush1.bf16.msra.mxu0 %v501
        %525 = vmatprep.subr.bf16.mxu0 0
        %526 = vmatpush1.bf16.msra.mxu0 %v502
        %527 = vmatprep.subr.bf16.mxu0 0
        %528 = vmatpush1.bf16.msra.mxu0 0
        %529 = vmatprep.subr.bf16.mxu0 0
        %530 = vmatpush1.bf16.msra.mxu0 0
        %531 = vmatprep.subr.bf16.mxu0 0
        %532 = vmatpush1.bf16.msra.mxu0 0
        %533 = vmatprep.subr.bf16.mxu0 0
        %534 = vmatpush1.bf16.msra.mxu0 0
        %535 = vmatprep.subr.bf16.mxu0 0
        %536 = vmatpush1.bf16.msra.mxu0 0
        %537 = vmatprep.subr.bf16.mxu0 0
        %538 = vmatpush1.bf16.msra.mxu0 0
        %539 = vmatprep.subr.bf16.mxu0 0
        %540 = vmatpush1.bf16.msra.mxu0 0
        %541 = vmatprep.subr.bf16.mxu0 0
        %542 = vmatpush1.bf16.msra.mxu0 0
        %543 = vmatprep.mubr.bf16.mxu0 0
        %544 = vmatmul.mubr.bf16.gmra.mrb[0].mxu0 %v337
        %v545 = vpop.f32.mrb[0].mxu0
        %v546 = vadd.f32 %v457, %v545
        %v547 = vpop.f32.mrb[0].mxu0
        %v548 = vpop.f32.mrb[0].mxu0
        %v549 = vadd.f32 %v460, %v548
        %v550 = vpop.f32.mrb[0].mxu0
        %551 = vdwg.mxu0
        %v552 = vld [vmem:[#allocation2 + $0x2] sm:$0xff]
        %v553 = vld [vmem:[#allocation2 + $0xa] sm:$0xff]
        %v554 = vpack.c.bf16 %v553, %v552
        %s555 = scalar_lea.vmem [#allocation7], 128
        %v556 = vld [vmem:[%s555] sm:$0xf]
        %v557 = vld [vmem:[%s555 + $0x4] sm:$0xf]
        %v558 = vld [vmem:[%s555 + $0x8] sm:$0xf]
        %v559 = vld [vmem:[%s555 + $0xc] sm:$0xf]
        %v560 = vld [vmem:[%s555 + $0x10] sm:$0xf]
        %v561 = vld [vmem:[%s555 + $0x14] sm:$0xf]
        %v562 = vld [vmem:[%s555 + $0x18] sm:$0xf]
        %v563 = vld [vmem:[%s555 + $0x1c] sm:$0xf]
        %v564 = vld [vmem:[%s555 + $0x20] sm:$0xf]
        %v565 = vld [vmem:[%s555 + $0x24] sm:$0xf]
        %v566 = vld [vmem:[%s555 + $0x28] sm:$0xf]
        %v567 = vld [vmem:[%s555 + $0x2c] sm:$0xf]
        %v568 = vld [vmem:[%s555 + $0x30] sm:$0xf]
        %v569 = vld [vmem:[%s555 + $0x34] sm:$0xf]
        %v570 = vld [vmem:[%s555 + $0x38] sm:$0xf]
        %v571 = vld [vmem:[%s555 + $0x3c] sm:$0xf]
        %v588 = vunpack.c.l.b16 %v556
        %v589 = vunpack.c.l.b16 %v557
        %v590 = vunpack.c.l.b16 %v558
        %v591 = vunpack.c.l.b16 %v559
        %v592 = vunpack.c.l.b16 %v560
        %v593 = vunpack.c.l.b16 %v561
        %v594 = vunpack.c.l.b16 %v562
        %v595 = vunpack.c.l.b16 %v563
        %v596 = vunpack.c.l.b16 %v564
        %v597 = vunpack.c.l.b16 %v565
        %v598 = vunpack.c.l.b16 %v566
        %v599 = vunpack.c.l.b16 %v567
        %v600 = vunpack.c.l.b16 %v568
        %v601 = vunpack.c.l.b16 %v569
        %v602 = vunpack.c.l.b16 %v570
        %v603 = vunpack.c.l.b16 %v571
        %v604 = vpack.c.b16 %v589, %v588
        %v605 = vpack.c.b16 %v591, %v590
        %v606 = vpack.c.b16 %v593, %v592
        %v607 = vpack.c.b16 %v595, %v594
        %v608 = vpack.c.b16 %v597, %v596
        %v609 = vpack.c.b16 %v599, %v598
        %v610 = vpack.c.b16 %v601, %v600
        %v611 = vpack.c.b16 %v603, %v602
        %620 = vmatprep.subr.bf16.mxu0 0
        %621 = vmatpush1.bf16.msra.mxu0 %v604
        %622 = vmatprep.subr.bf16.mxu0 0
        %623 = vmatpush1.bf16.msra.mxu0 %v605
        %624 = vmatprep.subr.bf16.mxu0 0
        %625 = vmatpush1.bf16.msra.mxu0 %v606
        %626 = vmatprep.subr.bf16.mxu0 0
        %627 = vmatpush1.bf16.msra.mxu0 %v607
        %628 = vmatprep.subr.bf16.mxu0 0
        %629 = vmatpush1.bf16.msra.mxu0 %v608
        %630 = vmatprep.subr.bf16.mxu0 0
        %631 = vmatpush1.bf16.msra.mxu0 %v609
        %632 = vmatprep.subr.bf16.mxu0 0
        %633 = vmatpush1.bf16.msra.mxu0 %v610
        %634 = vmatprep.subr.bf16.mxu0 0
        %635 = vmatpush1.bf16.msra.mxu0 %v611
        %636 = vmatprep.subr.bf16.mxu0 0
        %637 = vmatpush1.bf16.msra.mxu0 0
        %638 = vmatprep.subr.bf16.mxu0 0
        %639 = vmatpush1.bf16.msra.mxu0 0
        %640 = vmatprep.subr.bf16.mxu0 0
        %641 = vmatpush1.bf16.msra.mxu0 0
        %642 = vmatprep.subr.bf16.mxu0 0
        %643 = vmatpush1.bf16.msra.mxu0 0
        %644 = vmatprep.subr.bf16.mxu0 0
        %645 = vmatpush1.bf16.msra.mxu0 0
        %646 = vmatprep.subr.bf16.mxu0 0
        %647 = vmatpush1.bf16.msra.mxu0 0
        %648 = vmatprep.subr.bf16.mxu0 0
        %649 = vmatpush1.bf16.msra.mxu0 0
        %650 = vmatprep.subr.bf16.mxu0 0
        %651 = vmatpush1.bf16.msra.mxu0 0
        %652 = vmatprep.mubr.bf16.mxu0 0
        %653 = vmatmul.mubr.bf16.gmra.mrb[0].mxu0 %v554
        %v654 = vpop.f32.mrb[0].mxu0
        %v655 = vadd.f32 0.0, %v654
        %v656 = vpop.f32.mrb[0].mxu0
        %v657 = vpop.f32.mrb[0].mxu0
        %v658 = vadd.f32 0.0, %v657
        %v659 = vpop.f32.mrb[0].mxu0
        %660 = vdwg.mxu0
        %v661 = vadd.f32 %v546, %v655
        %v662 = vadd.f32 %v549, %v658
        %v663 = vld [vmem:[%s2] sm:$0x1]
        %v665 = vlaneseq
        %v666 = vshrl.u32 %v665, 7
        %v667 = vsub.s32 0, %v666
        %v668 = vrot.slane %v663, %v667
        %v670 = vmul.f32 %v661, %v668
        %v671 = vmul.f32 %v662, %v668
        %v672 = vld [vmem:[%s3] sm:$0x1]
        %v674 = vlaneseq
        %v675 = vshrl.u32 %v674, 7
        %v676 = vsub.s32 0, %v675
        %v677 = vrot.slane %v672, %v676
        %v679 = vadd.f32 %v670, %v677
        %v680 = vadd.f32 %v671, %v677
        %v681 = vmax.f32 %v679, 0.0
        %v682 = vmax.f32 %v680, 0.0
        %683 = vst [vmem:[#allocation3 + $0x1] sm:$0xff] %v681
        %684 = vst [vmem:[#allocation3 + $0x9] sm:$0xff] %v682
        %v685 = vld [vmem:[#allocation3] sm:$0xff]
        %v686 = vld [vmem:[#allocation3 + $0x8] sm:$0xff]
        %v687 = vpack.c.bf16 %v686, %v685
        %v688 = vld [vmem:[#allocation9] sm:$0xf]
        %v689 = vld [vmem:[#allocation9 + $0x4] sm:$0xf]
        %v690 = vld [vmem:[#allocation9 + $0x8] sm:$0xf]
        %v691 = vld [vmem:[#allocation9 + $0xc] sm:$0xf]
        %v692 = vld [vmem:[#allocation9 + $0x10] sm:$0xf]
        %v693 = vld [vmem:[#allocation9 + $0x14] sm:$0xf]
        %v694 = vld [vmem:[#allocation9 + $0x18] sm:$0xf]
        %v695 = vld [vmem:[#allocation9 + $0x1c] sm:$0xf]
        %v696 = vld [vmem:[#allocation9 + $0x20] sm:$0xf]
        %v697 = vld [vmem:[#allocation9 + $0x24] sm:$0xf]
        %v698 = vld [vmem:[#allocation9 + $0x28] sm:$0xf]
        %v699 = vld [vmem:[#allocation9 + $0x2c] sm:$0xf]
        %v700 = vld [vmem:[#allocation9 + $0x30] sm:$0xf]
        %v701 = vld [vmem:[#allocation9 + $0x34] sm:$0xf]
        %v702 = vld [vmem:[#allocation9 + $0x38] sm:$0xf]
        %v703 = vld [vmem:[#allocation9 + $0x3c] sm:$0xf]
        %v704 = vld [vmem:[#allocation3 + $0x1] sm:$0xff]
        %v705 = vld [vmem:[#allocation3 + $0x9] sm:$0xff]
        %v706 = vpack.c.bf16 %v705, %v704
        %s707 = scalar_lea.vmem [#allocation9], 64
        %v708 = vld [vmem:[%s707] sm:$0xf]
        %v709 = vld [vmem:[%s707 + $0x4] sm:$0xf]
        %v710 = vld [vmem:[%s707 + $0x8] sm:$0xf]
        %v711 = vld [vmem:[%s707 + $0xc] sm:$0xf]
        %v712 = vld [vmem:[%s707 + $0x10] sm:$0xf]
        %v713 = vld [vmem:[%s707 + $0x14] sm:$0xf]
        %v714 = vld [vmem:[%s707 + $0x18] sm:$0xf]
        %v715 = vld [vmem:[%s707 + $0x1c] sm:$0xf]
        %v716 = vld [vmem:[%s707 + $0x20] sm:$0xf]
        %v717 = vld [vmem:[%s707 + $0x24] sm:$0xf]
        %v718 = vld [vmem:[%s707 + $0x28] sm:$0xf]
        %v719 = vld [vmem:[%s707 + $0x2c] sm:$0xf]
        %v720 = vld [vmem:[%s707 + $0x30] sm:$0xf]
        %v721 = vld [vmem:[%s707 + $0x34] sm:$0xf]
        %v722 = vld [vmem:[%s707 + $0x38] sm:$0xf]
        %v723 = vld [vmem:[%s707 + $0x3c] sm:$0xf]
        %v740 = vunpack.c.l.b16 %v708
        %v741 = vunpack.c.l.b16 %v709
        %v742 = vunpack.c.l.b16 %v710
        %v743 = vunpack.c.l.b16 %v711
        %v744 = vunpack.c.l.b16 %v712
        %v745 = vunpack.c.l.b16 %v713
        %v746 = vunpack.c.l.b16 %v714
        %v747 = vunpack.c.l.b16 %v715
        %v748 = vunpack.c.l.b16 %v716
        %v749 = vunpack.c.l.b16 %v717
        %v750 = vunpack.c.l.b16 %v718
        %v751 = vunpack.c.l.b16 %v719
        %v752 = vunpack.c.l.b16 %v720
        %v753 = vunpack.c.l.b16 %v721
        %v754 = vunpack.c.l.b16 %v722
        %v755 = vunpack.c.l.b16 %v723
        %v756 = vpack.c.b16 %v741, %v740
        %v757 = vpack.c.b16 %v743, %v742
        %v758 = vpack.c.b16 %v745, %v744
        %v759 = vpack.c.b16 %v747, %v746
        %v760 = vpack.c.b16 %v749, %v748
        %v761 = vpack.c.b16 %v751, %v750
        %v762 = vpack.c.b16 %v753, %v752
        %v763 = vpack.c.b16 %v755, %v754
        %772 = vmatprep.subr.bf16.mxu0 0
        %773 = vmatpush1.bf16.msra.mxu0 %v756
        %774 = vmatprep.subr.bf16.mxu0 0
        %775 = vmatpush1.bf16.msra.mxu0 %v757
        %776 = vmatprep.subr.bf16.mxu0 0
        %777 = vmatpush1.bf16.msra.mxu0 %v758
        %778 = vmatprep.subr.bf16.mxu0 0
        %779 = vmatpush1.bf16.msra.mxu0 %v759
        %780 = vmatprep.subr.bf16.mxu0 0
        %781 = vmatpush1.bf16.msra.mxu0 %v760
        %782 = vmatprep.subr.bf16.mxu0 0
        %783 = vmatpush1.bf16.msra.mxu0 %v761
        %784 = vmatprep.subr.bf16.mxu0 0
        %785 = vmatpush1.bf16.msra.mxu0 %v762
        %786 = vmatprep.subr.bf16.mxu0 0
        %787 = vmatpush1.bf16.msra.mxu0 %v763
        %788 = vmatprep.subr.bf16.mxu0 0
        %789 = vmatpush1.bf16.msra.mxu0 0
        %790 = vmatprep.subr.bf16.mxu0 0
        %791 = vmatpush1.bf16.msra.mxu0 0
        %792 = vmatprep.subr.bf16.mxu0 0
        %793 = vmatpush1.bf16.msra.mxu0 0
        %794 = vmatprep.subr.bf16.mxu0 0
        %795 = vmatpush1.bf16.msra.mxu0 0
        %796 = vmatprep.subr.bf16.mxu0 0
        %797 = vmatpush1.bf16.msra.mxu0 0
        %798 = vmatprep.subr.bf16.mxu0 0
        %799 = vmatpush1.bf16.msra.mxu0 0
        %800 = vmatprep.subr.bf16.mxu0 0
        %801 = vmatpush1.bf16.msra.mxu0 0
        %802 = vmatprep.subr.bf16.mxu0 0
        %803 = vmatpush1.bf16.msra.mxu0 0
        %804 = vmatprep.mubr.bf16.mxu0 0
        %805 = vmatmul.mubr.bf16.gmra.mrb[0].mxu0 %v706
        %v806 = vpop.f32.mrb[0].mxu0
        %v807 = vadd.f32 0.0, %v806
        %v808 = vpop.f32.mrb[0].mxu0
        %v809 = vpop.f32.mrb[0].mxu0
        %v810 = vadd.f32 0.0, %v809
        %v811 = vpop.f32.mrb[0].mxu0
        %812 = vdwg.mxu0
        %v829 = vunpack.c.l.b16 %v688
        %v830 = vunpack.c.l.b16 %v689
        %v831 = vunpack.c.l.b16 %v690
        %v832 = vunpack.c.l.b16 %v691
        %v833 = vunpack.c.l.b16 %v692
        %v834 = vunpack.c.l.b16 %v693
        %v835 = vunpack.c.l.b16 %v694
        %v836 = vunpack.c.l.b16 %v695
        %v837 = vunpack.c.l.b16 %v696
        %v838 = vunpack.c.l.b16 %v697
        %v839 = vunpack.c.l.b16 %v698
        %v840 = vunpack.c.l.b16 %v699
        %v841 = vunpack.c.l.b16 %v700
        %v842 = vunpack.c.l.b16 %v701
        %v843 = vunpack.c.l.b16 %v702
        %v844 = vunpack.c.l.b16 %v703
        %v845 = vpack.c.b16 %v830, %v829
        %v846 = vpack.c.b16 %v832, %v831
        %v847 = vpack.c.b16 %v834, %v833
        %v848 = vpack.c.b16 %v836, %v835
        %v849 = vpack.c.b16 %v838, %v837
        %v850 = vpack.c.b16 %v840, %v839
        %v851 = vpack.c.b16 %v842, %v841
        %v852 = vpack.c.b16 %v844, %v843
        %861 = vmatprep.subr.bf16.mxu0 0
        %862 = vmatpush1.bf16.msra.mxu0 %v845
        %863 = vmatprep.subr.bf16.mxu0 0
        %864 = vmatpush1.bf16.msra.mxu0 %v846
        %865 = vmatprep.subr.bf16.mxu0 0
        %866 = vmatpush1.bf16.msra.mxu0 %v847
        %867 = vmatprep.subr.bf16.mxu0 0
        %868 = vmatpush1.bf16.msra.mxu0 %v848
        %869 = vmatprep.subr.bf16.mxu0 0
        %870 = vmatpush1.bf16.msra.mxu0 %v849
        %871 = vmatprep.subr.bf16.mxu0 0
        %872 = vmatpush1.bf16.msra.mxu0 %v850
        %873 = vmatprep.subr.bf16.mxu0 0
        %874 = vmatpush1.bf16.msra.mxu0 %v851
        %875 = vmatprep.subr.bf16.mxu0 0
        %876 = vmatpush1.bf16.msra.mxu0 %v852
        %877 = vmatprep.subr.bf16.mxu0 0
        %878 = vmatpush1.bf16.msra.mxu0 0
        %879 = vmatprep.subr.bf16.mxu0 0
        %880 = vmatpush1.bf16.msra.mxu0 0
        %881 = vmatprep.subr.bf16.mxu0 0
        %882 = vmatpush1.bf16.msra.mxu0 0
        %883 = vmatprep.subr.bf16.mxu0 0
        %884 = vmatpush1.bf16.msra.mxu0 0
        %885 = vmatprep.subr.bf16.mxu0 0
        %886 = vmatpush1.bf16.msra.mxu0 0
        %887 = vmatprep.subr.bf16.mxu0 0
        %888 = vmatpush1.bf16.msra.mxu0 0
        %889 = vmatprep.subr.bf16.mxu0 0
        %890 = vmatpush1.bf16.msra.mxu0 0
        %891 = vmatprep.subr.bf16.mxu0 0
        %892 = vmatpush1.bf16.msra.mxu0 0
        %893 = vmatprep.mubr.bf16.mxu0 0
        %894 = vmatmul.mubr.bf16.gmra.mrb[0].mxu0 %v687
        %v895 = vpop.f32.mrb[0].mxu0
        %v896 = vadd.f32 %v807, %v895
        %v897 = vpop.f32.mrb[0].mxu0
        %v898 = vpop.f32.mrb[0].mxu0
        %v899 = vadd.f32 %v810, %v898
        %v900 = vpop.f32.mrb[0].mxu0
        %901 = vdwg.mxu0
        %v902 = vld [vmem:[#allocation3 + $0x2] sm:$0xff]
        %v903 = vld [vmem:[#allocation3 + $0xa] sm:$0xff]
        %v904 = vpack.c.bf16 %v903, %v902
        %s905 = scalar_lea.vmem [#allocation9], 128
        %v906 = vld [vmem:[%s905] sm:$0xf]
        %v907 = vld [vmem:[%s905 + $0x4] sm:$0xf]
        %v908 = vld [vmem:[%s905 + $0x8] sm:$0xf]
        %v909 = vld [vmem:[%s905 + $0xc] sm:$0xf]
        %v910 = vld [vmem:[%s905 + $0x10] sm:$0xf]
        %v911 = vld [vmem:[%s905 + $0x14] sm:$0xf]
        %v912 = vld [vmem:[%s905 + $0x18] sm:$0xf]
        %v913 = vld [vmem:[%s905 + $0x1c] sm:$0xf]
        %v914 = vld [vmem:[%s905 + $0x20] sm:$0xf]
        %v915 = vld [vmem:[%s905 + $0x24] sm:$0xf]
        %v916 = vld [vmem:[%s905 + $0x28] sm:$0xf]
        %v917 = vld [vmem:[%s905 + $0x2c] sm:$0xf]
        %v918 = vld [vmem:[%s905 + $0x30] sm:$0xf]
        %v919 = vld [vmem:[%s905 + $0x34] sm:$0xf]
        %v920 = vld [vmem:[%s905 + $0x38] sm:$0xf]
        %v921 = vld [vmem:[%s905 + $0x3c] sm:$0xf]
        %v938 = vunpack.c.l.b16 %v906
        %v939 = vunpack.c.l.b16 %v907
        %v940 = vunpack.c.l.b16 %v908
        %v941 = vunpack.c.l.b16 %v909
        %v942 = vunpack.c.l.b16 %v910
        %v943 = vunpack.c.l.b16 %v911
        %v944 = vunpack.c.l.b16 %v912
        %v945 = vunpack.c.l.b16 %v913
        %v946 = vunpack.c.l.b16 %v914
        %v947 = vunpack.c.l.b16 %v915
        %v948 = vunpack.c.l.b16 %v916
        %v949 = vunpack.c.l.b16 %v917
        %v950 = vunpack.c.l.b16 %v918
        %v951 = vunpack.c.l.b16 %v919
        %v952 = vunpack.c.l.b16 %v920
        %v953 = vunpack.c.l.b16 %v921
        %v954 = vpack.c.b16 %v939, %v938
        %v955 = vpack.c.b16 %v941, %v940
        %v956 = vpack.c.b16 %v943, %v942
        %v957 = vpack.c.b16 %v945, %v944
        %v958 = vpack.c.b16 %v947, %v946
        %v959 = vpack.c.b16 %v949, %v948
        %v960 = vpack.c.b16 %v951, %v950
        %v961 = vpack.c.b16 %v953, %v952
        %970 = vmatprep.subr.bf16.mxu0 0
        %971 = vmatpush1.bf16.msra.mxu0 %v954
        %972 = vmatprep.subr.bf16.mxu0 0
        %973 = vmatpush1.bf16.msra.mxu0 %v955
        %974 = vmatprep.subr.bf16.mxu0 0
        %975 = vmatpush1.bf16.msra.mxu0 %v956
        %976 = vmatprep.subr.bf16.mxu0 0
        %977 = vmatpush1.bf16.msra.mxu0 %v957
        %978 = vmatprep.subr.bf16.mxu0 0
        %979 = vmatpush1.bf16.msra.mxu0 %v958
        %980 = vmatprep.subr.bf16.mxu0 0
        %981 = vmatpush1.bf16.msra.mxu0 %v959
        %982 = vmatprep.subr.bf16.mxu0 0
        %983 = vmatpush1.bf16.msra.mxu0 %v960
        %984 = vmatprep.subr.bf16.mxu0 0
        %985 = vmatpush1.bf16.msra.mxu0 %v961
        %986 = vmatprep.subr.bf16.mxu0 0
        %987 = vmatpush1.bf16.msra.mxu0 0
        %988 = vmatprep.subr.bf16.mxu0 0
        %989 = vmatpush1.bf16.msra.mxu0 0
        %990 = vmatprep.subr.bf16.mxu0 0
        %991 = vmatpush1.bf16.msra.mxu0 0
        %992 = vmatprep.subr.bf16.mxu0 0
        %993 = vmatpush1.bf16.msra.mxu0 0
        %994 = vmatprep.subr.bf16.mxu0 0
        %995 = vmatpush1.bf16.msra.mxu0 0
        %996 = vmatprep.subr.bf16.mxu0 0
        %997 = vmatpush1.bf16.msra.mxu0 0
        %998 = vmatprep.subr.bf16.mxu0 0
        %999 = vmatpush1.bf16.msra.mxu0 0
        %1000 = vmatprep.subr.bf16.mxu0 0
        %1001 = vmatpush1.bf16.msra.mxu0 0
        %1002 = vmatprep.mubr.bf16.mxu0 0
        %1003 = vmatmul.mubr.bf16.gmra.mrb[0].mxu0 %v904
        %v1004 = vpop.f32.mrb[0].mxu0
        %v1005 = vadd.f32 0.0, %v1004
        %v1006 = vpop.f32.mrb[0].mxu0
        %v1007 = vpop.f32.mrb[0].mxu0
        %v1008 = vadd.f32 0.0, %v1007
        %v1009 = vpop.f32.mrb[0].mxu0
        %1010 = vdwg.mxu0
        %v1011 = vadd.f32 %v896, %v1005
        %v1012 = vadd.f32 %v899, %v1008
        %v1013 = vld [vmem:[%s5] sm:$0x1]
        %v1015 = vlaneseq
        %v1016 = vshrl.u32 %v1015, 7
        %v1017 = vsub.s32 0, %v1016
        %v1018 = vrot.slane %v1013, %v1017
        %v1020 = vmul.f32 %v1011, %v1018
        %v1021 = vmul.f32 %v1012, %v1018
        %v1022 = vld [vmem:[%s6] sm:$0x1]
        %v1024 = vlaneseq
        %v1025 = vshrl.u32 %v1024, 7
        %v1026 = vsub.s32 0, %v1025
        %v1027 = vrot.slane %v1022, %v1026
        %v1029 = vadd.f32 %v1020, %v1027
        %v1030 = vadd.f32 %v1021, %v1027
        %v1031 = vadd.f32 %v1029, %v331
        %v1032 = vadd.f32 %v1030, %v332
        %v1033 = vmax.f32 %v1031, 0.0
        %v1034 = vmax.f32 %v1032, 0.0
        %1035 = vst [vmem:[%s325] sm:$0xff] %v1033
        %1036 = vst [vmem:[%s325 + $0x8] sm:$0xff] %v1034
        %s1037 = sand.u32 %s185, 1
        %s1038 = scalar_lea.sflag [#allocation6], %s1037
        %s1039 = sand.u32 %s185, 1
        %s1040 = smul.addr %s1039, 16
        %s1041 = scalar_lea.vmem [#allocation10], %s1040
        // Predicated region
        $region61: #{tpu_custom_call.1} parent=47 // pred_check
          %p1042 = pneg %p195
        $region62: #{tpu_custom_call.1} parent=47 // pred_check_branch
          %1044 = sbr.rel (%p1042) target = $region64
        $region63: #{tpu_custom_call.1} parent=47 // pred_region
          %s1046 = ssub.s32 256, 256
          %1047 = vsyncadd %s1038, %s1046
          %s1048 = smul.addr %s25, 2
          %s1049 = smul.addr %s1048, 128
          %s1050 = scalar_lea.hbm %s7, %s1049
          %s1051 = sshll.u32 %s1041, 4
          %s1052 = int_to_ptr.vmem [resolvable:$true] %s1051
          %1057 = dma.vmem_to_hbm [thread:$0]  %s1052, 256, %s1050, %s1038, 128, 128, 8
        $region64: #{tpu_custom_call.1} parent=47 // pred_fallthru
          _
      $region48: #{tpu_custom_call.1} parent=5 // pred_fallthru
        _
      %p1058 = scmp.le.s32.totalorder 2, %s20
      // Predicated region
      $region65: #{tpu_custom_call.1} parent=5 // pred_check
        %p1059 = pneg %p1058
      $region66: #{tpu_custom_call.1} parent=5 // pred_check_branch
        %1061 = sbr.rel (%p1059) target = $region68
      $region67: #{tpu_custom_call.1} parent=5 // pred_region
        %s1062 = ssub.s32 %s20, 2
        // Predicated region
        $region69: #{tpu_custom_call.1} parent=67 // pred_check
          %p1063 = pneg %p201
        $region70: #{tpu_custom_call.1} parent=67 // pred_check_branch
          %1065 = sbr.rel (%p1063) target = $region72
        $region71: #{tpu_custom_call.1} parent=67 // pred_region
          %s1066 = sand.u32 %s186, 1
          %s1067 = scalar_lea.sflag [#allocation6], %s1066
          %s1068 = sand.u32 %s186, 1
          %s1069 = smul.addr %s1068, 16
          %s1070 = scalar_lea.vmem [#allocation10], %s1069
          %1071 = dma.done %s1067, 256
        $region72: #{tpu_custom_call.1} parent=67 // pred_fallthru
          _
      $region68: #{tpu_custom_call.1} parent=5 // pred_fallthru
        _
    $region6: #{tpu_custom_call.1} parent=1 // loop_footer
      %s24 = sadd.s32 1, %s20
    $region7: #{tpu_custom_call.1} parent=1 // loop_footer_branch
      %19 = sbr.rel target = $region3
    $region8: #{tpu_custom_call.1} parent=1 // loop_exit
      _
    %1072 = vsyncpa [#allocation5], 1
    %s1073 = scalar_lea.sflag [#allocation5], 1
    %1074 = vsyncpa %s1073, 1
    %1075 = vsyncpa [#allocation8], 1
    %1076 = vsyncpa [#allocation6], 1
    %s1077 = scalar_lea.sflag [#allocation6], 1
    %1078 = vsyncpa %s1077, 1

</llo_original>
